<compile_context>
chip_gen: v7x
topology: tpu7x:2x2x1
jax: 0.10.0
libtpu: 0.0.40
codegen_flags: <defaults>
</compile_context>

<pallas_src>
import functools
from typing import NamedTuple

import jax
import jax.numpy as jnp
from jax.experimental import pallas as pl
from jax.experimental.pallas import tpu as pltpu


def _round_up(n, m):
    return ((n + m - 1) // m) * m


class Geometry(NamedTuple):
    """Static (hashable) padded-layout description of the fused param slab."""
    obs: int
    hidden: int
    n_actions: int
    obs_rows: int   # obs rounded up to 8 (sublane)
    h_pad: int      # hidden rounded up to 128 (lane)
    a_pad: int      # n_actions rounded up to 128 (lane, VMEM math only)
    r_b1: int       # slab row offset of b1
    r_w2: int       # slab row offset of w2
    r_b2: int       # slab row offset of b2
    slab_r: int
    slab_w: int


def _geometry(obs, hidden, n_actions):
    obs_rows = _round_up(obs, 8)
    h_pad = _round_up(hidden, 128)
    a_pad = _round_up(n_actions, 128)
    r_b1 = obs_rows
    r_w2 = obs_rows + 8
    r_b2 = obs_rows + 8 + h_pad
    slab_r = r_b2 + 8
    slab_w = max(h_pad, a_pad)
    return Geometry(obs, hidden, n_actions, obs_rows, h_pad, a_pad,
                    r_b1, r_w2, r_b2, slab_r, slab_w)


def pack_params(w1, b1, w2, b2, dtype=jnp.float32):
    """Build the fused zero-padded parameter slab ONCE per weight update.

    w1: [obs, hidden], b1: [hidden], w2: [hidden, n_actions], b2: [n_actions].
    Returns (slab [slab_r, slab_w] in `dtype`, Geometry of static ints).
    """
    obs, hidden = w1.shape
    n_actions = w2.shape[1]
    geo = _geometry(obs, hidden, n_actions)
    slab = jnp.zeros((geo.slab_r, geo.slab_w), dtype)
    slab = slab.at[:obs, :hidden].set(w1.astype(dtype))
    slab = slab.at[geo.r_b1, :hidden].set(b1.astype(dtype))
    slab = slab.at[geo.r_w2:geo.r_w2 + hidden, :n_actions].set(w2.astype(dtype))
    slab = slab.at[geo.r_b2, :n_actions].set(b2.astype(dtype))
    return slab, geo


def _mlp_kernel(x_ref, p_ref, o_ref, *, geo):
    """x_ref: [rows, obs_rows]; p_ref: fused slab [slab_r, slab_w];
    o_ref: [out_rows <= rows, n_actions] (unpadded action dim in HBM)."""
    x = x_ref[...]
    # Static slices of the VMEM-resident parameter slab (no extra DMAs).
    w1 = p_ref[pl.ds(0, geo.obs_rows), pl.ds(0, geo.h_pad)]      # [obs_rows, h_pad]
    b1 = p_ref[pl.ds(geo.r_b1, 1), pl.ds(0, geo.h_pad)]          # [1, h_pad]
    w2 = p_ref[pl.ds(geo.r_w2, geo.h_pad), pl.ds(0, geo.a_pad)]  # [h_pad, a_pad]
    b2 = p_ref[pl.ds(geo.r_b2, 1), pl.ds(0, geo.a_pad)]          # [1, a_pad]

    h = jnp.dot(x, w1, preferred_element_type=jnp.float32) + b1  # MXU + VPU
    h = jnp.maximum(h, 0.0)
    out = jnp.dot(h, w2, preferred_element_type=jnp.float32) + b2

    # Store only the rows/columns the output actually has (padded math stays
    # in VMEM; HBM writeback is exactly the useful bytes).
    rows, cols = o_ref.shape
    o_ref[...] = out[:rows, :cols].astype(o_ref.dtype)


def _cost(b_rows, geo, x_bytes, slab_bytes, out_bytes):
    flops = 2 * b_rows * (geo.obs_rows * geo.h_pad + geo.h_pad * geo.a_pad)
    return pl.CostEstimate(flops=flops, transcendentals=0,
                           bytes_accessed=x_bytes + slab_bytes + out_bytes)


def net_forward(x, slab, geo, *, small_batch_threshold=256, target_tile=2048):
    """Forward pass of Net. x: [B, obs]; slab/geo from pack_params.
    Returns [B, n_actions]."""
    B, obs = x.shape
    assert obs == geo.obs, "x feature dim does not match packed params"
    out_dtype = jnp.promote_types(x.dtype, slab.dtype)
    itemsize = jnp.dtype(out_dtype).itemsize
    slab_bytes = slab.size * slab.dtype.itemsize
    kernel = functools.partial(_mlp_kernel, geo=geo)

    if B <= small_batch_threshold:
        # Latency path (RL-style tiny batches): gridless, whole-array VMEM refs,
        # output is exactly [B, n_actions] -> no wrapper slice afterwards.
        b8 = _round_up(max(B, 1), 8)
        x_in = x
        if b8 != B or geo.obs_rows != obs:
            x_in = jnp.pad(x, ((0, b8 - B), (0, geo.obs_rows - obs)))
        out = pl.pallas_call(
            kernel,
            out_shape=jax.ShapeDtypeStruct((B, geo.n_actions), out_dtype),
            in_specs=[pl.BlockSpec(memory_space=pltpu.MemorySpace.VMEM),
                      pl.BlockSpec(memory_space=pltpu.MemorySpace.VMEM)],
            out_specs=pl.BlockSpec(memory_space=pltpu.MemorySpace.VMEM),
            cost_estimate=_cost(b8, geo,
                                x_in.size * x_in.dtype.itemsize,
                                slab_bytes,
                                B * geo.n_actions * itemsize),
        )(x_in, slab)
        return out

    # Throughput path: tile only the batch axis with large, balanced tiles and
    # at least 2 grid steps (v7x: both TensorCores get work). Weights stay
    # VMEM-resident across iterations (constant index_map).
    b8 = _round_up(B, 8)
    n_tiles = max(2, pl.cdiv(b8, target_tile))
    tb = _round_up(pl.cdiv(b8, n_tiles), 8)
    b_pad = tb * n_tiles
    x_in = x
    if b_pad != B or geo.obs_rows != obs:
        x_in = jnp.pad(x, ((0, b_pad - B), (0, geo.obs_rows - obs)))

    out = pl.pallas_call(
        kernel,
        out_shape=jax.ShapeDtypeStruct((b_pad, geo.n_actions), out_dtype),
        grid=(n_tiles,),
        in_specs=[pl.BlockSpec((tb, geo.obs_rows), lambda i: (i, 0)),
                  pl.BlockSpec((geo.slab_r, geo.slab_w), lambda i: (0, 0))],
        out_specs=pl.BlockSpec((tb, geo.n_actions), lambda i: (i, 0)),
        compiler_params=pltpu.CompilerParams(
            dimension_semantics=("parallel",)),   # v7x: shard batch over 2 TCs
        cost_estimate=_cost(b_pad, geo,
                            x_in.size * x_in.dtype.itemsize,
                            slab_bytes,
                            b_pad * geo.n_actions * itemsize),
    )(x_in, slab)
    return out[:B] if b_pad != B else out


def net_forward_from_params(x, w1, b1, w2, b2):
    """Convenience wrapper (packs params every call; prefer pack_params once)."""
    slab, geo = pack_params(w1, b1, w2, b2)
    return net_forward(x, slab, geo)


def net_forward_ref(x, w1, b1, w2, b2):
    """Pure-JAX reference (mirrors PyTorch forward)."""
    h = jnp.maximum(x @ w1 + b1, 0.0)
    return h @ w2 + b2


if __name__ == "__main__":
    # FrozenLake-flavored small sizes: one-hot obs of size 16, hidden 32, 4 actions.
    batch = 8
    obs_size = 16
    hidden_size = 32
    n_actions = 4

    key = jax.random.PRNGKey(0)
    kx, k1, k2, k3, k4 = jax.random.split(key, 5)

    x = jax.random.normal(kx, (batch, obs_size), dtype=jnp.float32)
    bound1 = 1.0 / obs_size ** 0.5
    bound2 = 1.0 / hidden_size ** 0.5
    w1 = jax.random.uniform(k1, (obs_size, hidden_size), jnp.float32, -bound1, bound1)
    b1 = jax.random.uniform(k2, (hidden_size,), jnp.float32, -bound1, bound1)
    w2 = jax.random.uniform(k3, (hidden_size, n_actions), jnp.float32, -bound2, bound2)
    b2 = jax.random.uniform(k4, (n_actions,), jnp.float32, -bound2, bound2)

    # Pack parameters ONCE (per weight update), then jit the lightweight forward.
    slab, geo = pack_params(w1, b1, w2, b2)
    fwd = jax.jit(functools.partial(net_forward, geo=geo))

    # Small-batch (gridless, latency) path: output is exactly [B, n_actions].
    out_small = jax.block_until_ready(fwd(x, slab))
    ref_small = net_forward_ref(x, w1, b1, w2, b2)
    assert out_small.shape == (batch, n_actions)
    assert jnp.allclose(out_small, ref_small, atol=1e-5, rtol=1e-5), "small-batch mismatch"

    # Large-batch (batch-tiled grid, >=2 parallel tiles, weights resident) path.
    big_batch = 4096
    xb = jax.random.normal(jax.random.PRNGKey(1), (big_batch, obs_size), jnp.float32)
    out_big = jax.block_until_ready(fwd(xb, slab))
    ref_big = net_forward_ref(xb, w1, b1, w2, b2)
    assert out_big.shape == (big_batch, n_actions)
    assert jnp.allclose(out_big, ref_big, atol=1e-4, rtol=1e-4), "big-batch mismatch"

    # Non-aligned batch through the grid path (exercises row padding/slicing).
    odd_batch = 3000
    xo = jax.random.normal(jax.random.PRNGKey(2), (odd_batch, obs_size), jnp.float32)
    out_odd = jax.block_until_ready(fwd(xo, slab))
    ref_odd = net_forward_ref(xo, w1, b1, w2, b2)
    assert out_odd.shape == (odd_batch, n_actions)
    assert jnp.allclose(out_odd, ref_odd, atol=1e-4, rtol=1e-4), "odd-batch mismatch"

    print("KERNEL_OK")
</pallas_src>

<mosaic_0001>
module attributes {stable_mosaic.version = 11 : i64} {
  func.func @_mlp_kernel(%arg0: memref<8x16xf32, #tpu.memory_space<vmem>>, %arg1: memref<160x128xf32, #tpu.memory_space<vmem>>, %arg2: memref<8x4xf32, #tpu.memory_space<vmem>>) attributes {dimension_semantics = [], scalar_prefetch = 0 : i64, scratch_operands = 0 : i64, tpu.core_type = #tpu.core_type<tc>} {
    %c0 = arith.constant 0 : index
    %c0_0 = arith.constant 0 : index
    %0 = vector.load %arg0[%c0, %c0_0] : memref<8x16xf32, #tpu.memory_space<vmem>>, vector<8x16xf32>
    %c0_1 = arith.constant 0 : index
    %c0_2 = arith.constant 0 : index
    %1 = vector.load %arg1[%c0_1, %c0_2] : memref<160x128xf32, #tpu.memory_space<vmem>>, vector<16x128xf32>
    %c16 = arith.constant 16 : index
    %c0_3 = arith.constant 0 : index
    %2 = vector.load %arg1[%c16, %c0_3] : memref<160x128xf32, #tpu.memory_space<vmem>>, vector<1x128xf32>
    %c24 = arith.constant 24 : index
    %c0_4 = arith.constant 0 : index
    %3 = vector.load %arg1[%c24, %c0_4] : memref<160x128xf32, #tpu.memory_space<vmem>>, vector<128x128xf32>
    %c152 = arith.constant 152 : index
    %c0_5 = arith.constant 0 : index
    %4 = vector.load %arg1[%c152, %c0_5] : memref<160x128xf32, #tpu.memory_space<vmem>>, vector<1x128xf32>
    %cst = arith.constant dense<0.000000e+00> : vector<8x128xf32>
    %5 = tpu.matmul %0, %1, %cst {dimension_numbers = #tpu.dot_dimension_numbers<[1], [0], [0], [1], [0, 0, 1, 1], [], []>} : vector<8x16xf32>, vector<16x128xf32>, vector<8x128xf32> -> vector<8x128xf32>
    %6 = vector.broadcast %2 : vector<1x128xf32> to vector<8x128xf32>
    %7 = arith.addf %5, %6 : vector<8x128xf32>
    %cst_6 = arith.constant 0.000000e+00 : f32
    %8 = vector.broadcast %cst_6 : f32 to vector<8x128xf32>
    %9 = arith.maximumf %7, %8 : vector<8x128xf32>
    %cst_7 = arith.constant dense<0.000000e+00> : vector<8x128xf32>
    %10 = tpu.matmul %9, %3, %cst_7 {dimension_numbers = #tpu.dot_dimension_numbers<[1], [0], [0], [1], [0, 0, 1, 1], [], []>} : vector<8x128xf32>, vector<128x128xf32>, vector<8x128xf32> -> vector<8x128xf32>
    %11 = vector.broadcast %4 : vector<1x128xf32> to vector<8x128xf32>
    %12 = arith.addf %10, %11 : vector<8x128xf32>
    %13 = vector.extract_strided_slice %12 {offsets = [0, 0], sizes = [8, 4], strides = [1, 1]} : vector<8x128xf32> to vector<8x4xf32>
    %c0_8 = arith.constant 0 : index
    %c0_9 = arith.constant 0 : index
    %14 = vector.load %arg2[%c0_8, %c0_9] : memref<8x4xf32, #tpu.memory_space<vmem>>, vector<8x4xf32>
    tpu.vector_store %arg2[%c0_8, %c0_9], %13 {strides = array<i32>} : memref<8x4xf32, #tpu.memory_space<vmem>>, vector<8x4xf32>,
    return
  }
}

</mosaic_0001>

<llo_original>
// kernel: net_forward.1
$region0: #{net_forward.1}
  #allocation0 [shape = 'u32[]', space=smem, size = 0x4, offset = 0x4, fixed_abs, tag = 'smem constant byte address 0x4 - core index']
  #allocation1 [shape = 'u32[144,128]{1,0:T(1,128)}', space=vmem, size = 0x12000, scoped, tag = 'internal scratch']
  %s0 = inlined_call_operand.hbm [shape: f32[8,16], index: 0, kind: input, shape index: {}]
  %s1 = inlined_call_operand.hbm [shape: f32[160,128], index: 1, kind: input, shape index: {}]
  %s2 = inlined_call_operand.vmem [shape: f32[8,4], index: 2, kind: output, shape index: {}]
  %s3 = sld [smem:[#allocation0]]
  $region26: #{net_forward.1} parent=0
    _
  %s5 = ssub.s32 1, %s3
  %s6 = scalar_select 0, %s5, %s3
  $region1: #{net_forward.1} parent=0
    #allocation2 [shape = 'u8[4096]{0}', space=vmem, size = 0x1000, scoped, tag = 'input window, operand 0, single buffered']
    #allocation3 [shape = 's32[1]{0}', space=sflag, size = 0x4, scoped, tag = 'scoped memory for net_forward.1']
    #allocation4 [shape = 'u8[81920]{0}', space=vmem, size = 0x14000, scoped, tag = 'input window, operand 1, single buffered']
    #allocation5 [shape = 's32[1]{0}', space=sflag, size = 0x4, scoped, tag = 'scoped memory for net_forward.1']
    %7 = vsyncpa [#allocation3], 0
    %8 = vsyncpa [#allocation5], 0
    // Predicated region
    $region2: #{net_forward.1} parent=1 // pred_check
      _
    $region3: #{net_forward.1} parent=1 // pred_check_branch
      %10 = sbr.rel (0) target = $region5
    $region4: #{net_forward.1} parent=1 // pred_region
      %s12 = ssub.s32 128, 128
      %13 = vsyncadd [#allocation3], %s12
      %s15 = sshll.u32 [#allocation2], 4
      %s16 = int_to_ptr.vmem [resolvable:$true] %s15
      %18 = dma.hbm_to_vmem [thread:$0]  %s0, 128, %s16, [#allocation3]
    $region5: #{net_forward.1} parent=1 // pred_fallthru
      _
    // Predicated region
    $region6: #{net_forward.1} parent=1 // pred_check
      _
    $region7: #{net_forward.1} parent=1 // pred_check_branch
      %20 = sbr.rel (0) target = $region9
    $region8: #{net_forward.1} parent=1 // pred_region
      %s22 = ssub.s32 2560, 2560
      %23 = vsyncadd [#allocation5], %s22
      %s24 = sshll.u32 [#allocation4], 4
      %s25 = int_to_ptr.vmem [resolvable:$true] %s24
      %30 = dma.hbm_to_vmem [thread:$0]  %s1, 2560, %s25, [#allocation5], 128, 128, 8
    $region9: #{net_forward.1} parent=1 // pred_fallthru
      _
    // Predicated region
    $region10: #{net_forward.1} parent=1 // pred_check
      _
    $region11: #{net_forward.1} parent=1 // pred_check_branch
      %32 = sbr.rel (0) target = $region13
    $region12: #{net_forward.1} parent=1 // pred_region
      %33 = dma.done [#allocation3], 128
    $region13: #{net_forward.1} parent=1 // pred_fallthru
      _
    // Predicated region
    $region14: #{net_forward.1} parent=1 // pred_check
      _
    $region15: #{net_forward.1} parent=1 // pred_check_branch
      %35 = sbr.rel (0) target = $region17
    $region16: #{net_forward.1} parent=1 // pred_region
      %36 = dma.done [#allocation5], 2560
    $region17: #{net_forward.1} parent=1 // pred_fallthru
      _
    %v37 = vld [vmem:[#allocation2] sm:$0xff]
    %v38 = vld [vmem:[#allocation4] sm:$0xff]
    %v39 = vld [vmem:[#allocation4 + $0x8] sm:$0xff]
    %v40 = vld [vmem:[#allocation4 + $0x10] sm:$0x1]
    %v41 = vld [vmem:[#allocation4 + $0x18] sm:$0xff]
    %v42 = vld [vmem:[#allocation4 + $0x20] sm:$0xff]
    %v43 = vld [vmem:[#allocation4 + $0x28] sm:$0xff]
    %v44 = vld [vmem:[#allocation4 + $0x30] sm:$0xff]
    %v45 = vld [vmem:[#allocation4 + $0x38] sm:$0xff]
    %v46 = vld [vmem:[#allocation4 + $0x40] sm:$0xff]
    %v47 = vld [vmem:[#allocation4 + $0x48] sm:$0xff]
    %v48 = vld [vmem:[#allocation4 + $0x50] sm:$0xff]
    %v49 = vld [vmem:[#allocation4 + $0x58] sm:$0xff]
    %v50 = vld [vmem:[#allocation4 + $0x60] sm:$0xff]
    %v51 = vld [vmem:[#allocation4 + $0x68] sm:$0xff]
    %v52 = vld [vmem:[#allocation4 + $0x70] sm:$0xff]
    %v53 = vld [vmem:[#allocation4 + $0x78] sm:$0xff]
    %v54 = vld [vmem:[#allocation4 + $0x80] sm:$0xff]
    %v55 = vld [vmem:[#allocation4 + $0x88] sm:$0xff]
    %v56 = vld [vmem:[#allocation4 + $0x90] sm:$0xff]
    %v57 = vld [vmem:[#allocation4 + $0x98] sm:$0x1]
    %v58 = vlaneseq
    %v59 = vshrl.u32 %v58, 7
    %v60 = vsub.s32 0, %v59
    %v61 = vrot.slane %v40, %v60
    %vm62 = vcmask 130048
    %v64 = vsel %vm62, %v37, 0
    %66 = vmatprep.subr.mxu0 0.0
    %67 = vmatpush1.msra.mxu0 %v38
    %68 = vmatprep.subr.mxu0 0.0
    %69 = vmatpush1.msra.mxu0 %v39
    %70 = vmatprep.subr.mxu0 0.0
    %71 = vmatpush1.msra.mxu0 0.0
    %72 = vmatprep.subr.mxu0 0.0
    %73 = vmatpush1.msra.mxu0 0.0
    %74 = vmatprep.subr.mxu0 0.0
    %75 = vmatpush1.msra.mxu0 0.0
    %76 = vmatprep.subr.mxu0 0.0
    %77 = vmatpush1.msra.mxu0 0.0
    %78 = vmatprep.subr.mxu0 0.0
    %79 = vmatpush1.msra.mxu0 0.0
    %80 = vmatprep.subr.mxu0 0.0
    %81 = vmatpush1.msra.mxu0 0.0
    %82 = vmatprep.subr.mxu0 0.0
    %83 = vmatpush1.msra.mxu0 0.0
    %84 = vmatprep.subr.mxu0 0.0
    %85 = vmatpush1.msra.mxu0 0.0
    %86 = vmatprep.subr.mxu0 0.0
    %87 = vmatpush1.msra.mxu0 0.0
    %88 = vmatprep.subr.mxu0 0.0
    %89 = vmatpush1.msra.mxu0 0.0
    %90 = vmatprep.subr.mxu0 0.0
    %91 = vmatpush1.msra.mxu0 0.0
    %92 = vmatprep.subr.mxu0 0.0
    %93 = vmatpush1.msra.mxu0 0.0
    %94 = vmatprep.subr.mxu0 0.0
    %95 = vmatpush1.msra.mxu0 0.0
    %96 = vmatprep.subr.mxu0 0.0
    %97 = vmatpush1.msra.mxu0 0.0
    %98 = vmatprep.subr.mxu0 0.0
    %99 = vmatpush1.msra.mxu0 0.0
    %100 = vmatprep.subr.mxu0 0.0
    %101 = vmatpush1.msra.mxu0 0.0
    %102 = vmatprep.subr.mxu0 0.0
    %103 = vmatpush1.msra.mxu0 0.0
    %104 = vmatprep.subr.mxu0 0.0
    %105 = vmatpush1.msra.mxu0 0.0
    %106 = vmatprep.subr.mxu0 0.0
    %107 = vmatpush1.msra.mxu0 0.0
    %108 = vmatprep.subr.mxu0 0.0
    %109 = vmatpush1.msra.mxu0 0.0
    %110 = vmatprep.subr.mxu0 0.0
    %111 = vmatpush1.msra.mxu0 0.0
    %112 = vmatprep.subr.mxu0 0.0
    %113 = vmatpush1.msra.mxu0 0.0
    %114 = vmatprep.subr.mxu0 0.0
    %115 = vmatpush1.msra.mxu0 0.0
    %116 = vmatprep.subr.mxu0 0.0
    %117 = vmatpush1.msra.mxu0 0.0
    %118 = vmatprep.subr.mxu0 0.0
    %119 = vmatpush1.msra.mxu0 0.0
    %120 = vmatprep.subr.mxu0 0.0
    %121 = vmatpush1.msra.mxu0 0.0
    %122 = vmatprep.subr.mxu0 0.0
    %123 = vmatpush1.msra.mxu0 0.0
    %124 = vmatprep.subr.mxu0 0.0
    %125 = vmatpush1.msra.mxu0 0.0
    %126 = vmatprep.subr.mxu0 0.0
    %127 = vmatpush1.msra.mxu0 0.0
    %128 = vmatprep.subr.mxu0 0.0
    %129 = vmatpush1.msra.mxu0 0.0
    %130 = vmatprep.mubr.f32.mxu0 0.0
    %131 = vmatmul.mubr.f32.gmra.mrb[0].mxu0 %v64
    %v132 = vpop.f32.mrb[0].mxu0
    %v133 = vadd.f32 %v61, %v132
    %v134 = vpop.f32.mrb[0].mxu0
    %135 = vdwg.mxu0
    %v136 = vmax.f32 %v133, 0.0
    %v137 = vlaneseq
    %v138 = vshrl.u32 %v137, 7
    %v139 = vsub.s32 0, %v138
    %v140 = vrot.slane %v57, %v139
    %141 = vmatprep.subr.mxu0 0.0
    %142 = vmatpush1.msra.mxu0 %v41
    %143 = vmatprep.subr.mxu0 0.0
    %144 = vmatpush1.msra.mxu0 %v42
    %145 = vmatprep.subr.mxu0 0.0
    %146 = vmatpush1.msra.mxu0 %v43
    %147 = vmatprep.subr.mxu0 0.0
    %148 = vmatpush1.msra.mxu0 %v44
    %149 = vmatprep.subr.mxu0 0.0
    %150 = vmatpush1.msra.mxu0 %v45
    %151 = vmatprep.subr.mxu0 0.0
    %152 = vmatpush1.msra.mxu0 %v46
    %153 = vmatprep.subr.mxu0 0.0
    %154 = vmatpush1.msra.mxu0 %v47
    %155 = vmatprep.subr.mxu0 0.0
    %156 = vmatpush1.msra.mxu0 %v48
    %157 = vmatprep.subr.mxu0 0.0
    %158 = vmatpush1.msra.mxu0 %v49
    %159 = vmatprep.subr.mxu0 0.0
    %160 = vmatpush1.msra.mxu0 %v50
    %161 = vmatprep.subr.mxu0 0.0
    %162 = vmatpush1.msra.mxu0 %v51
    %163 = vmatprep.subr.mxu0 0.0
    %164 = vmatpush1.msra.mxu0 %v52
    %165 = vmatprep.subr.mxu0 0.0
    %166 = vmatpush1.msra.mxu0 %v53
    %167 = vmatprep.subr.mxu0 0.0
    %168 = vmatpush1.msra.mxu0 %v54
    %169 = vmatprep.subr.mxu0 0.0
    %170 = vmatpush1.msra.mxu0 %v55
    %171 = vmatprep.subr.mxu0 0.0
    %172 = vmatpush1.msra.mxu0 %v56
    %173 = vmatprep.subr.mxu0 0.0
    %174 = vmatpush1.msra.mxu0 0.0
    %175 = vmatprep.subr.mxu0 0.0
    %176 = vmatpush1.msra.mxu0 0.0
    %177 = vmatprep.subr.mxu0 0.0
    %178 = vmatpush1.msra.mxu0 0.0
    %179 = vmatprep.subr.mxu0 0.0
    %180 = vmatpush1.msra.mxu0 0.0
    %181 = vmatprep.subr.mxu0 0.0
    %182 = vmatpush1.msra.mxu0 0.0
    %183 = vmatprep.subr.mxu0 0.0
    %184 = vmatpush1.msra.mxu0 0.0
    %185 = vmatprep.subr.mxu0 0.0
    %186 = vmatpush1.msra.mxu0 0.0
    %187 = vmatprep.subr.mxu0 0.0
    %188 = vmatpush1.msra.mxu0 0.0
    %189 = vmatprep.subr.mxu0 0.0
    %190 = vmatpush1.msra.mxu0 0.0
    %191 = vmatprep.subr.mxu0 0.0
    %192 = vmatpush1.msra.mxu0 0.0
    %193 = vmatprep.subr.mxu0 0.0
    %194 = vmatpush1.msra.mxu0 0.0
    %195 = vmatprep.subr.mxu0 0.0
    %196 = vmatpush1.msra.mxu0 0.0
    %197 = vmatprep.subr.mxu0 0.0
    %198 = vmatpush1.msra.mxu0 0.0
    %199 = vmatprep.subr.mxu0 0.0
    %200 = vmatpush1.msra.mxu0 0.0
    %201 = vmatprep.subr.mxu0 0.0
    %202 = vmatpush1.msra.mxu0 0.0
    %203 = vmatprep.subr.mxu0 0.0
    %204 = vmatpush1.msra.mxu0 0.0
    %205 = vmatprep.mubr.f32.mxu0 0.0
    %206 = vmatmul.mubr.f32.gmra.mrb[0].mxu0 %v136
    %v207 = vpop.f32.mrb[0].mxu0
    %v208 = vadd.f32 %v140, %v207
    %v209 = vpop.f32.mrb[0].mxu0
    %210 = vdwg.mxu0
    %vm211 = vcmask 31744
    %212 = vst.msk [vmem:[%s2] sm:$0xff] %vm211, %v208
    // Predicated region
    $region18: #{net_forward.1} parent=1 // pred_check
      _
    $region19: #{net_forward.1} parent=1 // pred_check_branch
      %214 = sbr.rel (0) target = $region21
    $region20: #{net_forward.1} parent=1 // pred_region
      _
    $region21: #{net_forward.1} parent=1 // pred_fallthru
      _
    // Predicated region
    $region22: #{net_forward.1} parent=1 // pred_check
      _
    $region23: #{net_forward.1} parent=1 // pred_check_branch
      %216 = sbr.rel (0) target = $region25
    $region24: #{net_forward.1} parent=1 // pred_region
      _
    $region25: #{net_forward.1} parent=1 // pred_fallthru
      _
    %217 = vsyncpa [#allocation3], 1
    %218 = vsyncpa [#allocation5], 1

</llo_original>
